<compile_context>
chip_gen: v7x
topology: tpu7x:2x2x1
jax: 0.10.0
libtpu: 0.0.40
codegen_flags: <defaults>
</compile_context>

<pallas_src>
import jax
import jax.numpy as jnp
from jax.experimental import pallas as pl
from jax.experimental.pallas import tpu as pltpu

D_IN, D_H1, D_H2, D_H3, D_OUT = 145, 512, 256, 128, 60
K_PAD = 256     # padded input-feature (K) dim: lane-aligned first matmul
OUT_PAD = 128   # padded output lane dim: lane-dense output stores


def _round_up(n, m):
    return (n + m - 1) // m * m


def _mlp_kernel(x_ref,
                w1_ref, b1_ref,
                w2_ref, b2_ref,
                w3_ref, b3_ref,
                w4_ref, b4_ref,
                o_ref):
    # Fused 4-layer MLP on one (TM, K_PAD) batch tile.
    # bf16 operands on the MXU, f32 accumulation, f32 bias add + ReLU on the VPU,
    # activations re-cast to bf16 between layers.
    x = x_ref[...]

    h = jnp.dot(x, w1_ref[...], preferred_element_type=jnp.float32) + b1_ref[...]
    h = jnp.maximum(h, 0.0).astype(jnp.bfloat16)

    h = jnp.dot(h, w2_ref[...], preferred_element_type=jnp.float32) + b2_ref[...]
    h = jnp.maximum(h, 0.0).astype(jnp.bfloat16)

    h = jnp.dot(h, w3_ref[...], preferred_element_type=jnp.float32) + b3_ref[...]
    h = jnp.maximum(h, 0.0).astype(jnp.bfloat16)

    out = jnp.dot(h, w4_ref[...], preferred_element_type=jnp.float32) + b4_ref[...]
    o_ref[...] = out.astype(o_ref.dtype)


def trajectory_prediction_net(x, params, *, tm=512):
    """x: (B, 145) float32. Returns (B, 60) float32 (== .view(-1, 30*2))."""
    (w1, b1), (w2, b2), (w3, b3), (w4, b4) = params
    B = x.shape[0]
    assert x.shape[1] == D_IN

    # ---- layout / dtype plumbing (wrapper side) ----
    # Zero-pad K (145 -> 256) on x columns and w1 rows, and the output lane dim
    # (60 -> 128) on w4/b4 columns. Weights go to bf16; biases stay f32.
    w1p = jnp.zeros((K_PAD, D_H1), jnp.float32).at[:D_IN, :].set(w1).astype(jnp.bfloat16)
    w2p = w2.astype(jnp.bfloat16)
    w3p = w3.astype(jnp.bfloat16)
    w4p = jnp.zeros((D_H3, OUT_PAD), jnp.float32).at[:, :D_OUT].set(w4).astype(jnp.bfloat16)
    b4p = jnp.zeros((1, OUT_PAD), jnp.float32).at[:, :D_OUT].set(b4)

    # Batch tile: large enough to feed the MXU, small enough that
    # 2x(x tile + out tile) + ~0.6 MiB of bf16 weights stays far under VMEM even on v7x.
    TM = min(tm, _round_up(B, 8))
    B_pad = _round_up(B, TM)
    xp = jnp.zeros((B_pad, K_PAD), jnp.float32).at[:B, :D_IN].set(x).astype(jnp.bfloat16)

    grid = (B_pad // TM,)

    # Weights/biases: full-array blocks with a constant block index so they are
    # DMA'd once and stay VMEM-resident across all batch tiles.
    def w_spec(a):
        return pl.BlockSpec(a.shape, lambda i: (0,) * a.ndim)

    weight_arrays = (w1p, b1, w2p, b2, w3p, b3, w4p, b4p)
    flops = 2 * B_pad * (K_PAD * D_H1 + D_H1 * D_H2 + D_H2 * D_H3 + D_H3 * OUT_PAD)
    bytes_accessed = (xp.size * xp.dtype.itemsize
                      + B_pad * OUT_PAD * 4
                      + sum(int(a.size) * a.dtype.itemsize for a in weight_arrays))

    out = pl.pallas_call(
        _mlp_kernel,
        out_shape=jax.ShapeDtypeStruct((B_pad, OUT_PAD), jnp.float32),
        grid=grid,
        in_specs=[pl.BlockSpec((TM, K_PAD), lambda i: (i, 0)),
                  w_spec(w1p), w_spec(b1),
                  w_spec(w2p), w_spec(b2),
                  w_spec(w3p), w_spec(b3),
                  w_spec(w4p), w_spec(b4p)],
        out_specs=pl.BlockSpec((TM, OUT_PAD), lambda i: (i, 0)),
        compiler_params=pltpu.CompilerParams(
            dimension_semantics=("parallel",),
            vmem_limit_bytes=32 * 1024 * 1024),
        cost_estimate=pl.CostEstimate(flops=flops,
                                      transcendentals=0,
                                      bytes_accessed=bytes_accessed),
    )(xp, w1p, b1, w2p, b2, w3p, b3, w4p, b4p)

    # Slice off batch/lane padding; .view(-1, 30*2).
    return out[:B, :D_OUT].reshape(-1, 30 * 2)


def init_params(key):
    """Deterministic init mimicking nn.Linear's uniform(-1/sqrt(fan_in), 1/sqrt(fan_in))."""
    dims = [(D_IN, D_H1), (D_H1, D_H2), (D_H2, D_H3), (D_H3, D_OUT)]
    params = []
    for (fan_in, fan_out) in dims:
        key, kw, kb = jax.random.split(key, 3)
        bound = 1.0 / jnp.sqrt(fan_in)
        w = jax.random.uniform(kw, (fan_in, fan_out), jnp.float32, -bound, bound)
        b = jax.random.uniform(kb, (1, fan_out), jnp.float32, -bound, bound)
        params.append((w, b))
    return params


def reference_forward(x, params, *, bf16=True):
    """Plain-JAX reference. bf16=True mirrors the kernel's dtype plumbing."""
    h = x
    for i, (w, b) in enumerate(params):
        ha = h.astype(jnp.bfloat16) if bf16 else h
        wa = w.astype(jnp.bfloat16) if bf16 else w
        h = jnp.dot(ha, wa, preferred_element_type=jnp.float32) + b
        if i < len(params) - 1:
            h = jnp.maximum(h, 0.0)
    return h.reshape(-1, D_OUT)


if __name__ == "__main__":
    key = jax.random.PRNGKey(0)
    k_params, k_x1, k_x2 = jax.random.split(key, 3)

    params = init_params(k_params)

    # Small batch of feature vectors of length 145 (what the module's forward implies).
    x = jax.random.normal(k_x1, (8, 145), dtype=jnp.float32)
    y = jax.block_until_ready(trajectory_prediction_net(x, params))
    assert y.shape == (8, 60), y.shape

    # Check against a dtype-matched (bf16 weights/activations, f32 accum) reference,
    # plus a looser sanity check against the pure-f32 reference.
    y_ref_bf16 = reference_forward(x, params, bf16=True)
    y_ref_f32 = reference_forward(x, params, bf16=False)
    assert jnp.allclose(y, y_ref_bf16, atol=2e-2, rtol=2e-2)
    assert jnp.allclose(y, y_ref_f32, atol=1e-1, rtol=1e-1)

    # Exercise the multi-tile (grid > 1) + batch-padding path with a ragged batch.
    xb = jax.random.normal(k_x2, (200, 145), dtype=jnp.float32)
    yb = jax.block_until_ready(trajectory_prediction_net(xb, params, tm=64))
    assert yb.shape == (200, 60), yb.shape
    assert jnp.allclose(yb, reference_forward(xb, params, bf16=True), atol=2e-2, rtol=2e-2)

    print("KERNEL_OK")
</pallas_src>

<mosaic_0001>
module attributes {stable_mosaic.version = 11 : i64} {
  func.func @_mlp_kernel(%arg0: i32, %arg1: memref<8x256xbf16, #tpu.memory_space<vmem>>, %arg2: memref<256x512xbf16, #tpu.memory_space<vmem>>, %arg3: memref<1x512xf32, #tpu.memory_space<vmem>>, %arg4: memref<512x256xbf16, #tpu.memory_space<vmem>>, %arg5: memref<1x256xf32, #tpu.memory_space<vmem>>, %arg6: memref<256x128xbf16, #tpu.memory_space<vmem>>, %arg7: memref<1x128xf32, #tpu.memory_space<vmem>>, %arg8: memref<128x128xbf16, #tpu.memory_space<vmem>>, %arg9: memref<1x128xf32, #tpu.memory_space<vmem>>, %arg10: memref<8x128xf32, #tpu.memory_space<vmem>>) attributes {dimension_semantics = [#tpu.dimension_semantics<parallel>], iteration_bounds = array<i64: 1>, scalar_prefetch = 0 : i64, scratch_operands = 0 : i64, tpu.core_type = #tpu.core_type<tc>, window_params = [{transform_indices = @transform_0, window_bounds = array<i64: 8, 256>}, {pipeline_mode = #tpu.pipeline_mode<synchronous>, transform_indices = @transform_1, window_bounds = array<i64: 256, 512>}, {pipeline_mode = #tpu.pipeline_mode<synchronous>, transform_indices = @transform_2, window_bounds = array<i64: 1, 512>}, {pipeline_mode = #tpu.pipeline_mode<synchronous>, transform_indices = @transform_3, window_bounds = array<i64: 512, 256>}, {pipeline_mode = #tpu.pipeline_mode<synchronous>, transform_indices = @transform_4, window_bounds = array<i64: 1, 256>}, {pipeline_mode = #tpu.pipeline_mode<synchronous>, transform_indices = @transform_5, window_bounds = array<i64: 256, 128>}, {pipeline_mode = #tpu.pipeline_mode<synchronous>, transform_indices = @transform_6, window_bounds = array<i64: 1, 128>}, {pipeline_mode = #tpu.pipeline_mode<synchronous>, transform_indices = @transform_7, window_bounds = array<i64: 128, 128>}, {pipeline_mode = #tpu.pipeline_mode<synchronous>, transform_indices = @transform_8, window_bounds = array<i64: 1, 128>}, {transform_indices = @transform_9, window_bounds = array<i64: 8, 128>}]} {
    %c0 = arith.constant 0 : index
    %c0_0 = arith.constant 0 : index
    %0 = vector.load %arg1[%c0, %c0_0] : memref<8x256xbf16, #tpu.memory_space<vmem>>, vector<8x256xbf16>
    %c0_1 = arith.constant 0 : index
    %c0_2 = arith.constant 0 : index
    %1 = vector.load %arg2[%c0_1, %c0_2] : memref<256x512xbf16, #tpu.memory_space<vmem>>, vector<256x512xbf16>
    %cst = arith.constant dense<0.000000e+00> : vector<8x512xf32>
    %2 = tpu.matmul %0, %1, %cst {dimension_numbers = #tpu.dot_dimension_numbers<[1], [0], [0], [1], [0, 0, 1, 1], [], []>} : vector<8x256xbf16>, vector<256x512xbf16>, vector<8x512xf32> -> vector<8x512xf32>
    %c0_3 = arith.constant 0 : index
    %c0_4 = arith.constant 0 : index
    %3 = vector.load %arg3[%c0_3, %c0_4] : memref<1x512xf32, #tpu.memory_space<vmem>>, vector<1x512xf32>
    %4 = vector.broadcast %3 : vector<1x512xf32> to vector<8x512xf32>
    %5 = arith.addf %2, %4 : vector<8x512xf32>
    %cst_5 = arith.constant 0.000000e+00 : f32
    %6 = vector.broadcast %cst_5 : f32 to vector<8x512xf32>
    %7 = arith.maximumf %5, %6 : vector<8x512xf32>
    %8 = arith.truncf %7 : vector<8x512xf32> to vector<8x512xbf16>
    %c0_6 = arith.constant 0 : index
    %c0_7 = arith.constant 0 : index
    %9 = vector.load %arg4[%c0_6, %c0_7] : memref<512x256xbf16, #tpu.memory_space<vmem>>, vector<512x256xbf16>
    %cst_8 = arith.constant dense<0.000000e+00> : vector<8x256xf32>
    %10 = tpu.matmul %8, %9, %cst_8 {dimension_numbers = #tpu.dot_dimension_numbers<[1], [0], [0], [1], [0, 0, 1, 1], [], []>} : vector<8x512xbf16>, vector<512x256xbf16>, vector<8x256xf32> -> vector<8x256xf32>
    %c0_9 = arith.constant 0 : index
    %c0_10 = arith.constant 0 : index
    %11 = vector.load %arg5[%c0_9, %c0_10] : memref<1x256xf32, #tpu.memory_space<vmem>>, vector<1x256xf32>
    %12 = vector.broadcast %11 : vector<1x256xf32> to vector<8x256xf32>
    %13 = arith.addf %10, %12 : vector<8x256xf32>
    %cst_11 = arith.constant 0.000000e+00 : f32
    %14 = vector.broadcast %cst_11 : f32 to vector<8x256xf32>
    %15 = arith.maximumf %13, %14 : vector<8x256xf32>
    %16 = arith.truncf %15 : vector<8x256xf32> to vector<8x256xbf16>
    %c0_12 = arith.constant 0 : index
    %c0_13 = arith.constant 0 : index
    %17 = vector.load %arg6[%c0_12, %c0_13] : memref<256x128xbf16, #tpu.memory_space<vmem>>, vector<256x128xbf16>
    %cst_14 = arith.constant dense<0.000000e+00> : vector<8x128xf32>
    %18 = tpu.matmul %16, %17, %cst_14 {dimension_numbers = #tpu.dot_dimension_numbers<[1], [0], [0], [1], [0, 0, 1, 1], [], []>} : vector<8x256xbf16>, vector<256x128xbf16>, vector<8x128xf32> -> vector<8x128xf32>
    %c0_15 = arith.constant 0 : index
    %c0_16 = arith.constant 0 : index
    %19 = vector.load %arg7[%c0_15, %c0_16] : memref<1x128xf32, #tpu.memory_space<vmem>>, vector<1x128xf32>
    %20 = vector.broadcast %19 : vector<1x128xf32> to vector<8x128xf32>
    %21 = arith.addf %18, %20 : vector<8x128xf32>
    %cst_17 = arith.constant 0.000000e+00 : f32
    %22 = vector.broadcast %cst_17 : f32 to vector<8x128xf32>
    %23 = arith.maximumf %21, %22 : vector<8x128xf32>
    %24 = arith.truncf %23 : vector<8x128xf32> to vector<8x128xbf16>
    %c0_18 = arith.constant 0 : index
    %c0_19 = arith.constant 0 : index
    %25 = vector.load %arg8[%c0_18, %c0_19] : memref<128x128xbf16, #tpu.memory_space<vmem>>, vector<128x128xbf16>
    %cst_20 = arith.constant dense<0.000000e+00> : vector<8x128xf32>
    %26 = tpu.matmul %24, %25, %cst_20 {dimension_numbers = #tpu.dot_dimension_numbers<[1], [0], [0], [1], [0, 0, 1, 1], [], []>} : vector<8x128xbf16>, vector<128x128xbf16>, vector<8x128xf32> -> vector<8x128xf32>
    %c0_21 = arith.constant 0 : index
    %c0_22 = arith.constant 0 : index
    %27 = vector.load %arg9[%c0_21, %c0_22] : memref<1x128xf32, #tpu.memory_space<vmem>>, vector<1x128xf32>
    %28 = vector.broadcast %27 : vector<1x128xf32> to vector<8x128xf32>
    %29 = arith.addf %26, %28 : vector<8x128xf32>
    %c0_23 = arith.constant 0 : index
    %c0_24 = arith.constant 0 : index
    %30 = vector.load %arg10[%c0_23, %c0_24] : memref<8x128xf32, #tpu.memory_space<vmem>>, vector<8x128xf32>
    tpu.vector_store %arg10[%c0_23, %c0_24], %29 {strides = array<i32>} : memref<8x128xf32, #tpu.memory_space<vmem>>, vector<8x128xf32>,
    return
  }
  func.func @transform_0(%arg0: i32) -> (i32, i32) {
    %c0_i32 = arith.constant 0 : i32
    %c0_i32_0 = arith.constant 0 : i32
    return %arg0, %c0_i32 : i32, i32
  }
  func.func @transform_1(%arg0: i32) -> (i32, i32) {
    %c0_i32 = arith.constant 0 : i32
    %c0_i32_0 = arith.constant 0 : i32
    %c0_i32_1 = arith.constant 0 : i32
    return %c0_i32, %c0_i32_0 : i32, i32
  }
  func.func @transform_2(%arg0: i32) -> (i32, i32) {
    %c0_i32 = arith.constant 0 : i32
    %c0_i32_0 = arith.constant 0 : i32
    %c0_i32_1 = arith.constant 0 : i32
    return %c0_i32, %c0_i32_0 : i32, i32
  }
  func.func @transform_3(%arg0: i32) -> (i32, i32) {
    %c0_i32 = arith.constant 0 : i32
    %c0_i32_0 = arith.constant 0 : i32
    %c0_i32_1 = arith.constant 0 : i32
    return %c0_i32, %c0_i32_0 : i32, i32
  }
  func.func @transform_4(%arg0: i32) -> (i32, i32) {
    %c0_i32 = arith.constant 0 : i32
    %c0_i32_0 = arith.constant 0 : i32
    %c0_i32_1 = arith.constant 0 : i32
    return %c0_i32, %c0_i32_0 : i32, i32
  }
  func.func @transform_5(%arg0: i32) -> (i32, i32) {
    %c0_i32 = arith.constant 0 : i32
    %c0_i32_0 = arith.constant 0 : i32
    %c0_i32_1 = arith.constant 0 : i32
    return %c0_i32, %c0_i32_0 : i32, i32
  }
  func.func @transform_6(%arg0: i32) -> (i32, i32) {
    %c0_i32 = arith.constant 0 : i32
    %c0_i32_0 = arith.constant 0 : i32
    %c0_i32_1 = arith.constant 0 : i32
    return %c0_i32, %c0_i32_0 : i32, i32
  }
  func.func @transform_7(%arg0: i32) -> (i32, i32) {
    %c0_i32 = arith.constant 0 : i32
    %c0_i32_0 = arith.constant 0 : i32
    %c0_i32_1 = arith.constant 0 : i32
    return %c0_i32, %c0_i32_0 : i32, i32
  }
  func.func @transform_8(%arg0: i32) -> (i32, i32) {
    %c0_i32 = arith.constant 0 : i32
    %c0_i32_0 = arith.constant 0 : i32
    %c0_i32_1 = arith.constant 0 : i32
    return %c0_i32, %c0_i32_0 : i32, i32
  }
  func.func @transform_9(%arg0: i32) -> (i32, i32) {
    %c0_i32 = arith.constant 0 : i32
    %c0_i32_0 = arith.constant 0 : i32
    return %arg0, %c0_i32 : i32, i32
  }
}

</mosaic_0001>

<llo_original>
// kernel: tpu_custom_call.1
$region0: #{tpu_custom_call.1}
  #allocation0 [shape = 'u32[]', space=smem, size = 0x4, offset = 0x4, fixed_abs, tag = 'smem constant byte address 0x4 - core index']
  #allocation1 [shape = 'u32[144,128]{1,0:T(1,128)}', space=vmem, size = 0x12000, scoped, tag = 'internal scratch']
  %s0 = inlined_call_operand.hbm [shape: bf16[8,256], index: 0, kind: input, shape index: {}]
  %s1 = inlined_call_operand.hbm [shape: bf16[256,512], index: 1, kind: input, shape index: {}]
  %s2 = inlined_call_operand.vmem [shape: f32[1,512], index: 2, kind: input, shape index: {}]
  %s3 = inlined_call_operand.hbm [shape: bf16[512,256], index: 3, kind: input, shape index: {}]
  %s4 = inlined_call_operand.vmem [shape: f32[1,256], index: 4, kind: input, shape index: {}]
  %s5 = inlined_call_operand.hbm [shape: bf16[256,128], index: 5, kind: input, shape index: {}]
  %s6 = inlined_call_operand.vmem [shape: f32[1,128], index: 6, kind: input, shape index: {}]
  %s7 = inlined_call_operand.hbm [shape: bf16[128,128], index: 7, kind: input, shape index: {}]
  %s8 = inlined_call_operand.vmem [shape: f32[1,128], index: 8, kind: input, shape index: {}]
  %s9 = inlined_call_operand.hbm [shape: f32[8,128], index: 9, kind: output, shape index: {}]
  %s10 = sld [smem:[#allocation0]]
  $region66: #{tpu_custom_call.1} parent=0
    _
  %s12 = ssub.s32 1, %s10
  %s13 = scalar_select 0, %s12, %s10
  $region1: #{tpu_custom_call.1} parent=0
    #allocation2 [shape = 'u8[4096]{0}', space=vmem, size = 0x1000, scoped, tag = 'input window, operand 0, single buffered']
    #allocation3 [shape = 's32[1]{0}', space=sflag, size = 0x4, scoped, tag = 'scoped memory for tpu_custom_call.1']
    #allocation4 [shape = 's32[1]{0}', space=sflag, size = 0x4, scoped, tag = 'scoped memory for tpu_custom_call.1']
    #allocation5 [shape = 'u8[262144]{0}', space=vmem, size = 0x40000, scoped, tag = 'input window, operand 1, single buffered']
    #allocation6 [shape = 's32[1]{0}', space=sflag, size = 0x4, scoped, tag = 'scoped memory for tpu_custom_call.1']
    #allocation7 [shape = 'u8[262144]{0}', space=vmem, size = 0x40000, scoped, tag = 'input window, operand 3, single buffered']
    #allocation8 [shape = 'u8[65536]{0}', space=vmem, size = 0x10000, scoped, tag = 'input window, operand 5, single buffered']
    #allocation9 [shape = 's32[1]{0}', space=sflag, size = 0x4, scoped, tag = 'scoped memory for tpu_custom_call.1']
    #allocation10 [shape = 'u8[32768]{0}', space=vmem, size = 0x8000, scoped, tag = 'input window, operand 7, single buffered']
    #allocation11 [shape = 'u8[4096]{0}', space=vmem, size = 0x1000, scoped, tag = 'output window, operand 0, single buffered']
    %14 = vsyncpa [#allocation3], 0
    %15 = vsyncpa [#allocation6], 0
    %16 = vsyncpa [#allocation9], 0
    %17 = vsyncpa [#allocation4], 0
    // Predicated region
    $region2: #{tpu_custom_call.1} parent=1 // pred_check
      _
    $region3: #{tpu_custom_call.1} parent=1 // pred_check_branch
      %19 = sbr.rel (0) target = $region5
    $region4: #{tpu_custom_call.1} parent=1 // pred_region
      %s21 = ssub.s32 128, 128
      %22 = vsyncadd [#allocation3], %s21
      %s24 = sshll.u32 [#allocation2], 4
      %s25 = int_to_ptr.vmem [resolvable:$true] %s24
      %27 = dma.hbm_to_vmem [thread:$0]  %s0, 128, %s25, [#allocation3]
    $region5: #{tpu_custom_call.1} parent=1 // pred_fallthru
      _
    // Predicated region
    $region6: #{tpu_custom_call.1} parent=1 // pred_check
      _
    $region7: #{tpu_custom_call.1} parent=1 // pred_check_branch
      %29 = sbr.rel (0) target = $region9
    $region8: #{tpu_custom_call.1} parent=1 // pred_region
      %s31 = ssub.s32 8192, 8192
      %32 = vsyncadd [#allocation6], %s31
      %s33 = sshll.u32 [#allocation5], 4
      %s34 = int_to_ptr.vmem [resolvable:$true] %s33
      %39 = dma.hbm_to_vmem [thread:$0]  %s1, 8192, %s34, [#allocation6], 256, 256, 16
    $region9: #{tpu_custom_call.1} parent=1 // pred_fallthru
      _
    // Predicated region
    $region10: #{tpu_custom_call.1} parent=1 // pred_check
      _
    $region11: #{tpu_custom_call.1} parent=1 // pred_check_branch
      %41 = sbr.rel (0) target = $region13
    $region12: #{tpu_custom_call.1} parent=1 // pred_region
      _
    $region13: #{tpu_custom_call.1} parent=1 // pred_fallthru
      _
    // Predicated region
    $region14: #{tpu_custom_call.1} parent=1 // pred_check
      _
    $region15: #{tpu_custom_call.1} parent=1 // pred_check_branch
      %43 = sbr.rel (0) target = $region17
    $region16: #{tpu_custom_call.1} parent=1 // pred_region
      %s45 = ssub.s32 8192, 8192
      %46 = vsyncadd [#allocation6], %s45
      %s47 = sshll.u32 [#allocation7], 4
      %s48 = int_to_ptr.vmem [resolvable:$true] %s47
      %53 = dma.hbm_to_vmem [thread:$0]  %s3, 8192, %s48, [#allocation6], 128, 128, 8
    $region17: #{tpu_custom_call.1} parent=1 // pred_fallthru
      _
    // Predicated region
    $region18: #{tpu_custom_call.1} parent=1 // pred_check
      _
    $region19: #{tpu_custom_call.1} parent=1 // pred_check_branch
      %55 = sbr.rel (0) target = $region21
    $region20: #{tpu_custom_call.1} parent=1 // pred_region
      _
    $region21: #{tpu_custom_call.1} parent=1 // pred_fallthru
      _
    // Predicated region
    $region22: #{tpu_custom_call.1} parent=1 // pred_check
      _
    $region23: #{tpu_custom_call.1} parent=1 // pred_check_branch
      %57 = sbr.rel (0) target = $region25
    $region24: #{tpu_custom_call.1} parent=1 // pred_region
      %s59 = ssub.s32 2048, 2048
      %60 = vsyncadd [#allocation9], %s59
      %s61 = sshll.u32 [#allocation8], 4
      %s62 = int_to_ptr.vmem [resolvable:$true] %s61
      %67 = dma.hbm_to_vmem [thread:$0]  %s5, 2048, %s62, [#allocation9], 64, 64, 4
    $region25: #{tpu_custom_call.1} parent=1 // pred_fallthru
      _
    // Predicated region
    $region26: #{tpu_custom_call.1} parent=1 // pred_check
      _
    $region27: #{tpu_custom_call.1} parent=1 // pred_check_branch
      %69 = sbr.rel (0) target = $region29
    $region28: #{tpu_custom_call.1} parent=1 // pred_region
      _
    $region29: #{tpu_custom_call.1} parent=1 // pred_fallthru
      _
    // Predicated region
    $region30: #{tpu_custom_call.1} parent=1 // pred_check
      _
    $region31: #{tpu_custom_call.1} parent=1 // pred_check_branch
      %71 = sbr.rel (0) target = $region33
    $region32: #{tpu_custom_call.1} parent=1 // pred_region
      %s73 = ssub.s32 1024, 1024
      %74 = vsyncadd [#allocation9], %s73
      %s75 = sshll.u32 [#allocation10], 4
      %s76 = int_to_ptr.vmem [resolvable:$true] %s75
      %81 = dma.hbm_to_vmem [thread:$0]  %s7, 1024, %s76, [#allocation9], 64, 64, 4
    $region33: #{tpu_custom_call.1} parent=1 // pred_fallthru
      _
    // Predicated region
    $region34: #{tpu_custom_call.1} parent=1 // pred_check
      _
    $region35: #{tpu_custom_call.1} parent=1 // pred_check_branch
      %83 = sbr.rel (0) target = $region37
    $region36: #{tpu_custom_call.1} parent=1 // pred_region
      _
    $region37: #{tpu_custom_call.1} parent=1 // pred_fallthru
      _
    // Predicated region
    $region38: #{tpu_custom_call.1} parent=1 // pred_check
      _
    $region39: #{tpu_custom_call.1} parent=1 // pred_check_branch
      %85 = sbr.rel (0) target = $region41
    $region40: #{tpu_custom_call.1} parent=1 // pred_region
      %86 = dma.done [#allocation3], 128
    $region41: #{tpu_custom_call.1} parent=1 // pred_fallthru
      _
    // Predicated region
    $region42: #{tpu_custom_call.1} parent=1 // pred_check
      _
    $region43: #{tpu_custom_call.1} parent=1 // pred_check_branch
      %88 = sbr.rel (0) target = $region45
    $region44: #{tpu_custom_call.1} parent=1 // pred_region
      %89 = dma.done [#allocation6], 8192
    $region45: #{tpu_custom_call.1} parent=1 // pred_fallthru
      _
    // Predicated region
    $region46: #{tpu_custom_call.1} parent=1 // pred_check
      _
    $region47: #{tpu_custom_call.1} parent=1 // pred_check_branch
      %91 = sbr.rel (0) target = $region49
    $region48: #{tpu_custom_call.1} parent=1 // pred_region
      %92 = dma.done [#allocation6], 8192
    $region49: #{tpu_custom_call.1} parent=1 // pred_fallthru
      _
    // Predicated region
    $region50: #{tpu_custom_call.1} parent=1 // pred_check
      _
    $region51: #{tpu_custom_call.1} parent=1 // pred_check_branch
      %94 = sbr.rel (0) target = $region53
    $region52: #{tpu_custom_call.1} parent=1 // pred_region
      %95 = dma.done [#allocation9], 2048
    $region53: #{tpu_custom_call.1} parent=1 // pred_fallthru
      _
    // Predicated region
    $region54: #{tpu_custom_call.1} parent=1 // pred_check
      _
    $region55: #{tpu_custom_call.1} parent=1 // pred_check_branch
      %97 = sbr.rel (0) target = $region57
    $region56: #{tpu_custom_call.1} parent=1 // pred_region
      %98 = dma.done [#allocation9], 1024
    $region57: #{tpu_custom_call.1} parent=1 // pred_fallthru
      _
    %v100 = vld [vmem:[#allocation2] sm:$0xff]
    %v101 = vld [vmem:[#allocation5] sm:$0xff]
    %v102 = vld [vmem:[#allocation5 + $0x8] sm:$0xff]
    %v103 = vld [vmem:[#allocation5 + $0x10] sm:$0xff]
    %v104 = vld [vmem:[#allocation5 + $0x18] sm:$0xff]
    %v105 = vld [vmem:[#allocation5 + $0x20] sm:$0xff]
    %v106 = vld [vmem:[#allocation5 + $0x28] sm:$0xff]
    %v107 = vld [vmem:[#allocation5 + $0x30] sm:$0xff]
    %v108 = vld [vmem:[#allocation5 + $0x38] sm:$0xff]
    %v109 = vld [vmem:[#allocation5 + $0x40] sm:$0xff]
    %v110 = vld [vmem:[#allocation5 + $0x48] sm:$0xff]
    %v111 = vld [vmem:[#allocation5 + $0x50] sm:$0xff]
    %v112 = vld [vmem:[#allocation5 + $0x58] sm:$0xff]
    %v113 = vld [vmem:[#allocation5 + $0x60] sm:$0xff]
    %v114 = vld [vmem:[#allocation5 + $0x68] sm:$0xff]
    %v115 = vld [vmem:[#allocation5 + $0x70] sm:$0xff]
    %v116 = vld [vmem:[#allocation5 + $0x78] sm:$0xff]
    %v117 = vld [vmem:[#allocation5 + $0x80] sm:$0xff]
    %v118 = vld [vmem:[#allocation5 + $0x88] sm:$0xff]
    %v119 = vld [vmem:[#allocation5 + $0x90] sm:$0xff]
    %v120 = vld [vmem:[#allocation5 + $0x98] sm:$0xff]
    %v121 = vld [vmem:[#allocation5 + $0xa0] sm:$0xff]
    %v122 = vld [vmem:[#allocation5 + $0xa8] sm:$0xff]
    %v123 = vld [vmem:[#allocation5 + $0xb0] sm:$0xff]
    %v124 = vld [vmem:[#allocation5 + $0xb8] sm:$0xff]
    %v125 = vld [vmem:[#allocation5 + $0xc0] sm:$0xff]
    %v126 = vld [vmem:[#allocation5 + $0xc8] sm:$0xff]
    %v127 = vld [vmem:[#allocation5 + $0xd0] sm:$0xff]
    %v128 = vld [vmem:[#allocation5 + $0xd8] sm:$0xff]
    %v129 = vld [vmem:[#allocation5 + $0xe0] sm:$0xff]
    %v130 = vld [vmem:[#allocation5 + $0xe8] sm:$0xff]
    %v131 = vld [vmem:[#allocation5 + $0xf0] sm:$0xff]
    %v132 = vld [vmem:[#allocation5 + $0xf8] sm:$0xff]
    %v133 = vld [vmem:[#allocation5 + $0x100] sm:$0xff]
    %v134 = vld [vmem:[#allocation5 + $0x108] sm:$0xff]
    %v135 = vld [vmem:[#allocation5 + $0x110] sm:$0xff]
    %v136 = vld [vmem:[#allocation5 + $0x118] sm:$0xff]
    %v137 = vld [vmem:[#allocation5 + $0x120] sm:$0xff]
    %v138 = vld [vmem:[#allocation5 + $0x128] sm:$0xff]
    %v139 = vld [vmem:[#allocation5 + $0x130] sm:$0xff]
    %v140 = vld [vmem:[#allocation5 + $0x138] sm:$0xff]
    %v141 = vld [vmem:[#allocation5 + $0x140] sm:$0xff]
    %v142 = vld [vmem:[#allocation5 + $0x148] sm:$0xff]
    %v143 = vld [vmem:[#allocation5 + $0x150] sm:$0xff]
    %v144 = vld [vmem:[#allocation5 + $0x158] sm:$0xff]
    %v145 = vld [vmem:[#allocation5 + $0x160] sm:$0xff]
    %v146 = vld [vmem:[#allocation5 + $0x168] sm:$0xff]
    %v147 = vld [vmem:[#allocation5 + $0x170] sm:$0xff]
    %v148 = vld [vmem:[#allocation5 + $0x178] sm:$0xff]
    %v149 = vld [vmem:[#allocation5 + $0x180] sm:$0xff]
    %v150 = vld [vmem:[#allocation5 + $0x188] sm:$0xff]
    %v151 = vld [vmem:[#allocation5 + $0x190] sm:$0xff]
    %v152 = vld [vmem:[#allocation5 + $0x198] sm:$0xff]
    %v153 = vld [vmem:[#allocation5 + $0x1a0] sm:$0xff]
    %v154 = vld [vmem:[#allocation5 + $0x1a8] sm:$0xff]
    %v155 = vld [vmem:[#allocation5 + $0x1b0] sm:$0xff]
    %v156 = vld [vmem:[#allocation5 + $0x1b8] sm:$0xff]
    %v157 = vld [vmem:[#allocation5 + $0x1c0] sm:$0xff]
    %v158 = vld [vmem:[#allocation5 + $0x1c8] sm:$0xff]
    %v159 = vld [vmem:[#allocation5 + $0x1d0] sm:$0xff]
    %v160 = vld [vmem:[#allocation5 + $0x1d8] sm:$0xff]
    %v161 = vld [vmem:[#allocation5 + $0x1e0] sm:$0xff]
    %v162 = vld [vmem:[#allocation5 + $0x1e8] sm:$0xff]
    %v163 = vld [vmem:[#allocation5 + $0x1f0] sm:$0xff]
    %v164 = vld [vmem:[#allocation5 + $0x1f8] sm:$0xff]
    %v165 = vld [vmem:[%s2] sm:$0xf]
    %v167 = vlaneseq
    %v168 = vshrl.u32 %v167, 7
    %v169 = vsub.s32 0, %v168
    %v170 = vrot.slane %v165, %v169
    %v171 = vlaneseq
    %v172 = vshrl.u32 %v171, 7
    %v173 = vsub.s32 1, %v172
    %v174 = vrot.slane %v165, %v173
    %v175 = vlaneseq
    %v176 = vshrl.u32 %v175, 7
    %v177 = vsub.s32 2, %v176
    %v178 = vrot.slane %v165, %v177
    %v179 = vlaneseq
    %v180 = vshrl.u32 %v179, 7
    %v181 = vsub.s32 3, %v180
    %v182 = vrot.slane %v165, %v181
    %v188 = vunpack.c.l.b16 %v100
    %v189 = vunpack.c.h.b16 %v100
    %v190 = vpack.c.b16 %v188, %v188
    %v191 = vpack.c.b16 %v189, %v189
    %v258 = vunpack.c.l.b16 %v101
    %v259 = vunpack.c.h.b16 %v101
    %v260 = vunpack.c.l.b16 %v102
    %v261 = vunpack.c.h.b16 %v102
    %v262 = vunpack.c.l.b16 %v103
    %v263 = vunpack.c.h.b16 %v103
    %v264 = vunpack.c.l.b16 %v104
    %v265 = vunpack.c.h.b16 %v104
    %v266 = vunpack.c.l.b16 %v105
    %v267 = vunpack.c.h.b16 %v105
    %v268 = vunpack.c.l.b16 %v106
    %v269 = vunpack.c.h.b16 %v106
    %v270 = vunpack.c.l.b16 %v107
    %v271 = vunpack.c.h.b16 %v107
    %v272 = vunpack.c.l.b16 %v108
    %v273 = vunpack.c.h.b16 %v108
    %v274 = vunpack.c.l.b16 %v109
    %v275 = vunpack.c.h.b16 %v109
    %v276 = vunpack.c.l.b16 %v110
    %v277 = vunpack.c.h.b16 %v110
    %v278 = vunpack.c.l.b16 %v111
    %v279 = vunpack.c.h.b16 %v111
    %v280 = vunpack.c.l.b16 %v112
    %v281 = vunpack.c.h.b16 %v112
    %v282 = vunpack.c.l.b16 %v113
    %v283 = vunpack.c.h.b16 %v113
    %v284 = vunpack.c.l.b16 %v114
    %v285 = vunpack.c.h.b16 %v114
    %v286 = vunpack.c.l.b16 %v115
    %v287 = vunpack.c.h.b16 %v115
    %v288 = vunpack.c.l.b16 %v116
    %v289 = vunpack.c.h.b16 %v116
    %v290 = vunpack.c.l.b16 %v117
    %v291 = vunpack.c.h.b16 %v117
    %v292 = vunpack.c.l.b16 %v118
    %v293 = vunpack.c.h.b16 %v118
    %v294 = vunpack.c.l.b16 %v119
    %v295 = vunpack.c.h.b16 %v119
    %v296 = vunpack.c.l.b16 %v120
    %v297 = vunpack.c.h.b16 %v120
    %v298 = vunpack.c.l.b16 %v121
    %v299 = vunpack.c.h.b16 %v121
    %v300 = vunpack.c.l.b16 %v122
    %v301 = vunpack.c.h.b16 %v122
    %v302 = vunpack.c.l.b16 %v123
    %v303 = vunpack.c.h.b16 %v123
    %v304 = vunpack.c.l.b16 %v124
    %v305 = vunpack.c.h.b16 %v124
    %v306 = vunpack.c.l.b16 %v125
    %v307 = vunpack.c.h.b16 %v125
    %v308 = vunpack.c.l.b16 %v126
    %v309 = vunpack.c.h.b16 %v126
    %v310 = vunpack.c.l.b16 %v127
    %v311 = vunpack.c.h.b16 %v127
    %v312 = vunpack.c.l.b16 %v128
    %v313 = vunpack.c.h.b16 %v128
    %v314 = vunpack.c.l.b16 %v129
    %v315 = vunpack.c.h.b16 %v129
    %v316 = vunpack.c.l.b16 %v130
    %v317 = vunpack.c.h.b16 %v130
    %v318 = vunpack.c.l.b16 %v131
    %v319 = vunpack.c.h.b16 %v131
    %v320 = vunpack.c.l.b16 %v132
    %v321 = vunpack.c.h.b16 %v132
    %v322 = vunpack.c.l.b16 %v133
    %v323 = vunpack.c.h.b16 %v133
    %v324 = vunpack.c.l.b16 %v134
    %v325 = vunpack.c.h.b16 %v134
    %v326 = vunpack.c.l.b16 %v135
    %v327 = vunpack.c.h.b16 %v135
    %v328 = vunpack.c.l.b16 %v136
    %v329 = vunpack.c.h.b16 %v136
    %v330 = vunpack.c.l.b16 %v137
    %v331 = vunpack.c.h.b16 %v137
    %v332 = vunpack.c.l.b16 %v138
    %v333 = vunpack.c.h.b16 %v138
    %v334 = vunpack.c.l.b16 %v139
    %v335 = vunpack.c.h.b16 %v139
    %v336 = vunpack.c.l.b16 %v140
    %v337 = vunpack.c.h.b16 %v140
    %v338 = vunpack.c.l.b16 %v141
    %v339 = vunpack.c.h.b16 %v141
    %v340 = vunpack.c.l.b16 %v142
    %v341 = vunpack.c.h.b16 %v142
    %v342 = vunpack.c.l.b16 %v143
    %v343 = vunpack.c.h.b16 %v143
    %v344 = vunpack.c.l.b16 %v144
    %v345 = vunpack.c.h.b16 %v144
    %v346 = vunpack.c.l.b16 %v145
    %v347 = vunpack.c.h.b16 %v145
    %v348 = vunpack.c.l.b16 %v146
    %v349 = vunpack.c.h.b16 %v146
    %v350 = vunpack.c.l.b16 %v147
    %v351 = vunpack.c.h.b16 %v147
    %v352 = vunpack.c.l.b16 %v148
    %v353 = vunpack.c.h.b16 %v148
    %v354 = vunpack.c.l.b16 %v149
    %v355 = vunpack.c.h.b16 %v149
    %v356 = vunpack.c.l.b16 %v150
    %v357 = vunpack.c.h.b16 %v150
    %v358 = vunpack.c.l.b16 %v151
    %v359 = vunpack.c.h.b16 %v151
    %v360 = vunpack.c.l.b16 %v152
    %v361 = vunpack.c.h.b16 %v152
    %v362 = vunpack.c.l.b16 %v153
    %v363 = vunpack.c.h.b16 %v153
    %v364 = vunpack.c.l.b16 %v154
    %v365 = vunpack.c.h.b16 %v154
    %v366 = vunpack.c.l.b16 %v155
    %v367 = vunpack.c.h.b16 %v155
    %v368 = vunpack.c.l.b16 %v156
    %v369 = vunpack.c.h.b16 %v156
    %v370 = vunpack.c.l.b16 %v157
    %v371 = vunpack.c.h.b16 %v157
    %v372 = vunpack.c.l.b16 %v158
    %v373 = vunpack.c.h.b16 %v158
    %v374 = vunpack.c.l.b16 %v159
    %v375 = vunpack.c.h.b16 %v159
    %v376 = vunpack.c.l.b16 %v160
    %v377 = vunpack.c.h.b16 %v160
    %v378 = vunpack.c.l.b16 %v161
    %v379 = vunpack.c.h.b16 %v161
    %v380 = vunpack.c.l.b16 %v162
    %v381 = vunpack.c.h.b16 %v162
    %v382 = vunpack.c.l.b16 %v163
    %v383 = vunpack.c.h.b16 %v163
    %v384 = vunpack.c.l.b16 %v164
    %v385 = vunpack.c.h.b16 %v164
    %v386 = vpack.c.b16 %v262, %v258
    %v387 = vpack.c.b16 %v263, %v259
    %v388 = vpack.c.b16 %v264, %v260
    %v389 = vpack.c.b16 %v265, %v261
    %v390 = vpack.c.b16 %v270, %v266
    %v391 = vpack.c.b16 %v271, %v267
    %v392 = vpack.c.b16 %v272, %v268
    %v393 = vpack.c.b16 %v273, %v269
    %v394 = vpack.c.b16 %v278, %v274
    %v395 = vpack.c.b16 %v279, %v275
    %v396 = vpack.c.b16 %v280, %v276
    %v397 = vpack.c.b16 %v281, %v277
    %v398 = vpack.c.b16 %v286, %v282
    %v399 = vpack.c.b16 %v287, %v283
    %v400 = vpack.c.b16 %v288, %v284
    %v401 = vpack.c.b16 %v289, %v285
    %v402 = vpack.c.b16 %v294, %v290
    %v403 = vpack.c.b16 %v295, %v291
    %v404 = vpack.c.b16 %v296, %v292
    %v405 = vpack.c.b16 %v297, %v293
    %v406 = vpack.c.b16 %v302, %v298
    %v407 = vpack.c.b16 %v303, %v299
    %v408 = vpack.c.b16 %v304, %v300
    %v409 = vpack.c.b16 %v305, %v301
    %v410 = vpack.c.b16 %v310, %v306
    %v411 = vpack.c.b16 %v311, %v307
    %v412 = vpack.c.b16 %v312, %v308
    %v413 = vpack.c.b16 %v313, %v309
    %v414 = vpack.c.b16 %v318, %v314
    %v415 = vpack.c.b16 %v319, %v315
    %v416 = vpack.c.b16 %v320, %v316
    %v417 = vpack.c.b16 %v321, %v317
    %v418 = vpack.c.b16 %v326, %v322
    %v419 = vpack.c.b16 %v327, %v323
    %v420 = vpack.c.b16 %v328, %v324
    %v421 = vpack.c.b16 %v329, %v325
    %v422 = vpack.c.b16 %v334, %v330
    %v423 = vpack.c.b16 %v335, %v331
    %v424 = vpack.c.b16 %v336, %v332
    %v425 = vpack.c.b16 %v337, %v333
    %v426 = vpack.c.b16 %v342, %v338
    %v427 = vpack.c.b16 %v343, %v339
    %v428 = vpack.c.b16 %v344, %v340
    %v429 = vpack.c.b16 %v345, %v341
    %v430 = vpack.c.b16 %v350, %v346
    %v431 = vpack.c.b16 %v351, %v347
    %v432 = vpack.c.b16 %v352, %v348
    %v433 = vpack.c.b16 %v353, %v349
    %v434 = vpack.c.b16 %v358, %v354
    %v435 = vpack.c.b16 %v359, %v355
    %v436 = vpack.c.b16 %v360, %v356
    %v437 = vpack.c.b16 %v361, %v357
    %v438 = vpack.c.b16 %v366, %v362
    %v439 = vpack.c.b16 %v367, %v363
    %v440 = vpack.c.b16 %v368, %v364
    %v441 = vpack.c.b16 %v369, %v365
    %v442 = vpack.c.b16 %v374, %v370
    %v443 = vpack.c.b16 %v375, %v371
    %v444 = vpack.c.b16 %v376, %v372
    %v445 = vpack.c.b16 %v377, %v373
    %v446 = vpack.c.b16 %v382, %v378
    %v447 = vpack.c.b16 %v383, %v379
    %v448 = vpack.c.b16 %v384, %v380
    %v449 = vpack.c.b16 %v385, %v381
    %514 = vmatprep.subr.bf16.mxu0 %v387
    %515 = vmatpush1.bf16.msra.mxu0 %v386
    %516 = vmatprep.subr.bf16.mxu0 %v391
    %517 = vmatpush1.bf16.msra.mxu0 %v390
    %518 = vmatprep.subr.bf16.mxu0 %v395
    %519 = vmatpush1.bf16.msra.mxu0 %v394
    %520 = vmatprep.subr.bf16.mxu0 %v399
    %521 = vmatpush1.bf16.msra.mxu0 %v398
    %522 = vmatprep.subr.bf16.mxu0 %v403
    %523 = vmatpush1.bf16.msra.mxu0 %v402
    %524 = vmatprep.subr.bf16.mxu0 %v407
    %525 = vmatpush1.bf16.msra.mxu0 %v406
    %526 = vmatprep.subr.bf16.mxu0 %v411
    %527 = vmatpush1.bf16.msra.mxu0 %v410
    %528 = vmatprep.subr.bf16.mxu0 %v415
    %529 = vmatpush1.bf16.msra.mxu0 %v414
    %530 = vmatprep.subr.bf16.mxu0 %v419
    %531 = vmatpush1.bf16.msra.mxu0 %v418
    %532 = vmatprep.subr.bf16.mxu0 %v423
    %533 = vmatpush1.bf16.msra.mxu0 %v422
    %534 = vmatprep.subr.bf16.mxu0 %v427
    %535 = vmatpush1.bf16.msra.mxu0 %v426
    %536 = vmatprep.subr.bf16.mxu0 %v431
    %537 = vmatpush1.bf16.msra.mxu0 %v430
    %538 = vmatprep.subr.bf16.mxu0 %v435
    %539 = vmatpush1.bf16.msra.mxu0 %v434
    %540 = vmatprep.subr.bf16.mxu0 %v439
    %541 = vmatpush1.bf16.msra.mxu0 %v438
    %542 = vmatprep.subr.bf16.mxu0 %v443
    %543 = vmatpush1.bf16.msra.mxu0 %v442
    %544 = vmatprep.subr.bf16.mxu0 %v447
    %545 = vmatpush1.bf16.msra.mxu0 %v446
    %546 = vmatprep.mubr.bf16.mxu0 %v191
    %547 = vmatmul.mubr.bf16.gmra.mrb[0].mxu0 %v190
    %v548 = vpop.f32.mrb[0].mxu0
    %v549 = vadd.f32 %v170, %v548
    %v550 = vpop.f32.mrb[0].mxu0
    %v551 = vadd.f32 %v174, %v550
    %v552 = vpop.f32.mrb[0].mxu0
    %v553 = vpop.f32.mrb[0].mxu0
    %554 = vdwg.mxu0
    %555 = vmatprep.subr.bf16.mxu0 %v389
    %556 = vmatpush1.bf16.msra.mxu0 %v388
    %557 = vmatprep.subr.bf16.mxu0 %v393
    %558 = vmatpush1.bf16.msra.mxu0 %v392
    %559 = vmatprep.subr.bf16.mxu0 %v397
    %560 = vmatpush1.bf16.msra.mxu0 %v396
    %561 = vmatprep.subr.bf16.mxu0 %v401
    %562 = vmatpush1.bf16.msra.mxu0 %v400
    %563 = vmatprep.subr.bf16.mxu0 %v405
    %564 = vmatpush1.bf16.msra.mxu0 %v404
    %565 = vmatprep.subr.bf16.mxu0 %v409
    %566 = vmatpush1.bf16.msra.mxu0 %v408
    %567 = vmatprep.subr.bf16.mxu0 %v413
    %568 = vmatpush1.bf16.msra.mxu0 %v412
    %569 = vmatprep.subr.bf16.mxu0 %v417
    %570 = vmatpush1.bf16.msra.mxu0 %v416
    %571 = vmatprep.subr.bf16.mxu0 %v421
    %572 = vmatpush1.bf16.msra.mxu0 %v420
    %573 = vmatprep.subr.bf16.mxu0 %v425
    %574 = vmatpush1.bf16.msra.mxu0 %v424
    %575 = vmatprep.subr.bf16.mxu0 %v429
    %576 = vmatpush1.bf16.msra.mxu0 %v428
    %577 = vmatprep.subr.bf16.mxu0 %v433
    %578 = vmatpush1.bf16.msra.mxu0 %v432
    %579 = vmatprep.subr.bf16.mxu0 %v437
    %580 = vmatpush1.bf16.msra.mxu0 %v436
    %581 = vmatprep.subr.bf16.mxu0 %v441
    %582 = vmatpush1.bf16.msra.mxu0 %v440
    %583 = vmatprep.subr.bf16.mxu0 %v445
    %584 = vmatpush1.bf16.msra.mxu0 %v444
    %585 = vmatprep.subr.bf16.mxu0 %v449
    %586 = vmatpush1.bf16.msra.mxu0 %v448
    %587 = vmatprep.mubr.bf16.mxu0 %v191
    %588 = vmatmul.mubr.bf16.gmra.mrb[0].mxu0 %v190
    %v589 = vpop.f32.mrb[0].mxu0
    %v590 = vadd.f32 %v178, %v589
    %v591 = vpop.f32.mrb[0].mxu0
    %v592 = vadd.f32 %v182, %v591
    %v593 = vpop.f32.mrb[0].mxu0
    %v594 = vpop.f32.mrb[0].mxu0
    %595 = vdwg.mxu0
    %v596 = vmax.f32 %v549, 0.0
    %v597 = vmax.f32 %v551, 0.0
    %v598 = vmax.f32 %v590, 0.0
    %v599 = vmax.f32 %v592, 0.0
    %v600 = vpack.c.bf16 %v596, %v596
    %v601 = vpack.c.bf16 %v597, %v597
    %v602 = vpack.c.bf16 %v598, %v598
    %v603 = vpack.c.bf16 %v599, %v599
    %v604 = vld [vmem:[#allocation7] sm:$0xff]
    %v605 = vld [vmem:[#allocation7 + $0x8] sm:$0xff]
    %v606 = vld [vmem:[#allocation7 + $0x10] sm:$0xff]
    %v607 = vld [vmem:[#allocation7 + $0x18] sm:$0xff]
    %v608 = vld [vmem:[#allocation7 + $0x20] sm:$0xff]
    %v609 = vld [vmem:[#allocation7 + $0x28] sm:$0xff]
    %v610 = vld [vmem:[#allocation7 + $0x30] sm:$0xff]
    %v611 = vld [vmem:[#allocation7 + $0x38] sm:$0xff]
    %v612 = vld [vmem:[#allocation7 + $0x40] sm:$0xff]
    %v613 = vld [vmem:[#allocation7 + $0x48] sm:$0xff]
    %v614 = vld [vmem:[#allocation7 + $0x50] sm:$0xff]
    %v615 = vld [vmem:[#allocation7 + $0x58] sm:$0xff]
    %v616 = vld [vmem:[#allocation7 + $0x60] sm:$0xff]
    %v617 = vld [vmem:[#allocation7 + $0x68] sm:$0xff]
    %v618 = vld [vmem:[#allocation7 + $0x70] sm:$0xff]
    %v619 = vld [vmem:[#allocation7 + $0x78] sm:$0xff]
    %v620 = vld [vmem:[#allocation7 + $0x80] sm:$0xff]
    %v621 = vld [vmem:[#allocation7 + $0x88] sm:$0xff]
    %v622 = vld [vmem:[#allocation7 + $0x90] sm:$0xff]
    %v623 = vld [vmem:[#allocation7 + $0x98] sm:$0xff]
    %v624 = vld [vmem:[#allocation7 + $0xa0] sm:$0xff]
    %v625 = vld [vmem:[#allocation7 + $0xa8] sm:$0xff]
    %v626 = vld [vmem:[#allocation7 + $0xb0] sm:$0xff]
    %v627 = vld [vmem:[#allocation7 + $0xb8] sm:$0xff]
    %v628 = vld [vmem:[#allocation7 + $0xc0] sm:$0xff]
    %v629 = vld [vmem:[#allocation7 + $0xc8] sm:$0xff]
    %v630 = vld [vmem:[#allocation7 + $0xd0] sm:$0xff]
    %v631 = vld [vmem:[#allocation7 + $0xd8] sm:$0xff]
    %v632 = vld [vmem:[#allocation7 + $0xe0] sm:$0xff]
    %v633 = vld [vmem:[#allocation7 + $0xe8] sm:$0xff]
    %v634 = vld [vmem:[#allocation7 + $0xf0] sm:$0xff]
    %v635 = vld [vmem:[#allocation7 + $0xf8] sm:$0xff]
    %v636 = vld [vmem:[#allocation7 + $0x100] sm:$0xff]
    %v637 = vld [vmem:[#allocation7 + $0x108] sm:$0xff]
    %v638 = vld [vmem:[#allocation7 + $0x110] sm:$0xff]
    %v639 = vld [vmem:[#allocation7 + $0x118] sm:$0xff]
    %v640 = vld [vmem:[#allocation7 + $0x120] sm:$0xff]
    %v641 = vld [vmem:[#allocation7 + $0x128] sm:$0xff]
    %v642 = vld [vmem:[#allocation7 + $0x130] sm:$0xff]
    %v643 = vld [vmem:[#allocation7 + $0x138] sm:$0xff]
    %v644 = vld [vmem:[#allocation7 + $0x140] sm:$0xff]
    %v645 = vld [vmem:[#allocation7 + $0x148] sm:$0xff]
    %v646 = vld [vmem:[#allocation7 + $0x150] sm:$0xff]
    %v647 = vld [vmem:[#allocation7 + $0x158] sm:$0xff]
    %v648 = vld [vmem:[#allocation7 + $0x160] sm:$0xff]
    %v649 = vld [vmem:[#allocation7 + $0x168] sm:$0xff]
    %v650 = vld [vmem:[#allocation7 + $0x170] sm:$0xff]
    %v651 = vld [vmem:[#allocation7 + $0x178] sm:$0xff]
    %v652 = vld [vmem:[#allocation7 + $0x180] sm:$0xff]
    %v653 = vld [vmem:[#allocation7 + $0x188] sm:$0xff]
    %v654 = vld [vmem:[#allocation7 + $0x190] sm:$0xff]
    %v655 = vld [vmem:[#allocation7 + $0x198] sm:$0xff]
    %v656 = vld [vmem:[#allocation7 + $0x1a0] sm:$0xff]
    %v657 = vld [vmem:[#allocation7 + $0x1a8] sm:$0xff]
    %v658 = vld [vmem:[#allocation7 + $0x1b0] sm:$0xff]
    %v659 = vld [vmem:[#allocation7 + $0x1b8] sm:$0xff]
    %v660 = vld [vmem:[#allocation7 + $0x1c0] sm:$0xff]
    %v661 = vld [vmem:[#allocation7 + $0x1c8] sm:$0xff]
    %v662 = vld [vmem:[#allocation7 + $0x1d0] sm:$0xff]
    %v663 = vld [vmem:[#allocation7 + $0x1d8] sm:$0xff]
    %v664 = vld [vmem:[#allocation7 + $0x1e0] sm:$0xff]
    %v665 = vld [vmem:[#allocation7 + $0x1e8] sm:$0xff]
    %v666 = vld [vmem:[#allocation7 + $0x1f0] sm:$0xff]
    %v667 = vld [vmem:[#allocation7 + $0x1f8] sm:$0xff]
    %v668 = vld [vmem:[%s4] sm:$0x3]
    %v670 = vlaneseq
    %v671 = vshrl.u32 %v670, 7
    %v672 = vsub.s32 0, %v671
    %v673 = vrot.slane %v668, %v672
    %v674 = vlaneseq
    %v675 = vshrl.u32 %v674, 7
    %v676 = vsub.s32 1, %v675
    %v677 = vrot.slane %v668, %v676
    %v744 = vunpack.c.l.b16 %v604
    %v745 = vunpack.c.h.b16 %v604
    %v746 = vunpack.c.l.b16 %v605
    %v747 = vunpack.c.h.b16 %v605
    %v748 = vunpack.c.l.b16 %v606
    %v749 = vunpack.c.h.b16 %v606
    %v750 = vunpack.c.l.b16 %v607
    %v751 = vunpack.c.h.b16 %v607
    %v752 = vunpack.c.l.b16 %v608
    %v753 = vunpack.c.h.b16 %v608
    %v754 = vunpack.c.l.b16 %v609
    %v755 = vunpack.c.h.b16 %v609
    %v756 = vunpack.c.l.b16 %v610
    %v757 = vunpack.c.h.b16 %v610
    %v758 = vunpack.c.l.b16 %v611
    %v759 = vunpack.c.h.b16 %v611
    %v760 = vunpack.c.l.b16 %v612
    %v761 = vunpack.c.h.b16 %v612
    %v762 = vunpack.c.l.b16 %v613
    %v763 = vunpack.c.h.b16 %v613
    %v764 = vunpack.c.l.b16 %v614
    %v765 = vunpack.c.h.b16 %v614
    %v766 = vunpack.c.l.b16 %v615
    %v767 = vunpack.c.h.b16 %v615
    %v768 = vunpack.c.l.b16 %v616
    %v769 = vunpack.c.h.b16 %v616
    %v770 = vunpack.c.l.b16 %v617
    %v771 = vunpack.c.h.b16 %v617
    %v772 = vunpack.c.l.b16 %v618
    %v773 = vunpack.c.h.b16 %v618
    %v774 = vunpack.c.l.b16 %v619
    %v775 = vunpack.c.h.b16 %v619
    %v776 = vunpack.c.l.b16 %v620
    %v777 = vunpack.c.h.b16 %v620
    %v778 = vunpack.c.l.b16 %v621
    %v779 = vunpack.c.h.b16 %v621
    %v780 = vunpack.c.l.b16 %v622
    %v781 = vunpack.c.h.b16 %v622
    %v782 = vunpack.c.l.b16 %v623
    %v783 = vunpack.c.h.b16 %v623
    %v784 = vunpack.c.l.b16 %v624
    %v785 = vunpack.c.h.b16 %v624
    %v786 = vunpack.c.l.b16 %v625
    %v787 = vunpack.c.h.b16 %v625
    %v788 = vunpack.c.l.b16 %v626
    %v789 = vunpack.c.h.b16 %v626
    %v790 = vunpack.c.l.b16 %v627
    %v791 = vunpack.c.h.b16 %v627
    %v792 = vunpack.c.l.b16 %v628
    %v793 = vunpack.c.h.b16 %v628
    %v794 = vunpack.c.l.b16 %v629
    %v795 = vunpack.c.h.b16 %v629
    %v796 = vunpack.c.l.b16 %v630
    %v797 = vunpack.c.h.b16 %v630
    %v798 = vunpack.c.l.b16 %v631
    %v799 = vunpack.c.h.b16 %v631
    %v800 = vunpack.c.l.b16 %v632
    %v801 = vunpack.c.h.b16 %v632
    %v802 = vunpack.c.l.b16 %v633
    %v803 = vunpack.c.h.b16 %v633
    %v804 = vunpack.c.l.b16 %v634
    %v805 = vunpack.c.h.b16 %v634
    %v806 = vunpack.c.l.b16 %v635
    %v807 = vunpack.c.h.b16 %v635
    %v808 = vunpack.c.l.b16 %v636
    %v809 = vunpack.c.h.b16 %v636
    %v810 = vunpack.c.l.b16 %v637
    %v811 = vunpack.c.h.b16 %v637
    %v812 = vunpack.c.l.b16 %v638
    %v813 = vunpack.c.h.b16 %v638
    %v814 = vunpack.c.l.b16 %v639
    %v815 = vunpack.c.h.b16 %v639
    %v816 = vunpack.c.l.b16 %v640
    %v817 = vunpack.c.h.b16 %v640
    %v818 = vunpack.c.l.b16 %v641
    %v819 = vunpack.c.h.b16 %v641
    %v820 = vunpack.c.l.b16 %v642
    %v821 = vunpack.c.h.b16 %v642
    %v822 = vunpack.c.l.b16 %v643
    %v823 = vunpack.c.h.b16 %v643
    %v824 = vunpack.c.l.b16 %v644
    %v825 = vunpack.c.h.b16 %v644
    %v826 = vunpack.c.l.b16 %v645
    %v827 = vunpack.c.h.b16 %v645
    %v828 = vunpack.c.l.b16 %v646
    %v829 = vunpack.c.h.b16 %v646
    %v830 = vunpack.c.l.b16 %v647
    %v831 = vunpack.c.h.b16 %v647
    %v832 = vunpack.c.l.b16 %v648
    %v833 = vunpack.c.h.b16 %v648
    %v834 = vunpack.c.l.b16 %v649
    %v835 = vunpack.c.h.b16 %v649
    %v836 = vunpack.c.l.b16 %v650
    %v837 = vunpack.c.h.b16 %v650
    %v838 = vunpack.c.l.b16 %v651
    %v839 = vunpack.c.h.b16 %v651
    %v840 = vunpack.c.l.b16 %v652
    %v841 = vunpack.c.h.b16 %v652
    %v842 = vunpack.c.l.b16 %v653
    %v843 = vunpack.c.h.b16 %v653
    %v844 = vunpack.c.l.b16 %v654
    %v845 = vunpack.c.h.b16 %v654
    %v846 = vunpack.c.l.b16 %v655
    %v847 = vunpack.c.h.b16 %v655
    %v848 = vunpack.c.l.b16 %v656
    %v849 = vunpack.c.h.b16 %v656
    %v850 = vunpack.c.l.b16 %v657
    %v851 = vunpack.c.h.b16 %v657
    %v852 = vunpack.c.l.b16 %v658
    %v853 = vunpack.c.h.b16 %v658
    %v854 = vunpack.c.l.b16 %v659
    %v855 = vunpack.c.h.b16 %v659
    %v856 = vunpack.c.l.b16 %v660
    %v857 = vunpack.c.h.b16 %v660
    %v858 = vunpack.c.l.b16 %v661
    %v859 = vunpack.c.h.b16 %v661
    %v860 = vunpack.c.l.b16 %v662
    %v861 = vunpack.c.h.b16 %v662
    %v862 = vunpack.c.l.b16 %v663
    %v863 = vunpack.c.h.b16 %v663
    %v864 = vunpack.c.l.b16 %v664
    %v865 = vunpack.c.h.b16 %v664
    %v866 = vunpack.c.l.b16 %v665
    %v867 = vunpack.c.h.b16 %v665
    %v868 = vunpack.c.l.b16 %v666
    %v869 = vunpack.c.h.b16 %v666
    %v870 = vunpack.c.l.b16 %v667
    %v871 = vunpack.c.h.b16 %v667
    %v872 = vpack.c.b16 %v746, %v744
    %v873 = vpack.c.b16 %v747, %v745
    %v874 = vpack.c.b16 %v750, %v748
    %v875 = vpack.c.b16 %v751, %v749
    %v876 = vpack.c.b16 %v754, %v752
    %v877 = vpack.c.b16 %v755, %v753
    %v878 = vpack.c.b16 %v758, %v756
    %v879 = vpack.c.b16 %v759, %v757
    %v880 = vpack.c.b16 %v762, %v760
    %v881 = vpack.c.b16 %v763, %v761
    %v882 = vpack.c.b16 %v766, %v764
    %v883 = vpack.c.b16 %v767, %v765
    %v884 = vpack.c.b16 %v770, %v768
    %v885 = vpack.c.b16 %v771, %v769
    %v886 = vpack.c.b16 %v774, %v772
    %v887 = vpack.c.b16 %v775, %v773
    %v888 = vpack.c.b16 %v778, %v776
    %v889 = vpack.c.b16 %v779, %v777
    %v890 = vpack.c.b16 %v782, %v780
    %v891 = vpack.c.b16 %v783, %v781
    %v892 = vpack.c.b16 %v786, %v784
    %v893 = vpack.c.b16 %v787, %v785
    %v894 = vpack.c.b16 %v790, %v788
    %v895 = vpack.c.b16 %v791, %v789
    %v896 = vpack.c.b16 %v794, %v792
    %v897 = vpack.c.b16 %v795, %v793
    %v898 = vpack.c.b16 %v798, %v796
    %v899 = vpack.c.b16 %v799, %v797
    %v900 = vpack.c.b16 %v802, %v800
    %v901 = vpack.c.b16 %v803, %v801
    %v902 = vpack.c.b16 %v806, %v804
    %v903 = vpack.c.b16 %v807, %v805
    %v904 = vpack.c.b16 %v810, %v808
    %v905 = vpack.c.b16 %v811, %v809
    %v906 = vpack.c.b16 %v814, %v812
    %v907 = vpack.c.b16 %v815, %v813
    %v908 = vpack.c.b16 %v818, %v816
    %v909 = vpack.c.b16 %v819, %v817
    %v910 = vpack.c.b16 %v822, %v820
    %v911 = vpack.c.b16 %v823, %v821
    %v912 = vpack.c.b16 %v826, %v824
    %v913 = vpack.c.b16 %v827, %v825
    %v914 = vpack.c.b16 %v830, %v828
    %v915 = vpack.c.b16 %v831, %v829
    %v916 = vpack.c.b16 %v834, %v832
    %v917 = vpack.c.b16 %v835, %v833
    %v918 = vpack.c.b16 %v838, %v836
    %v919 = vpack.c.b16 %v839, %v837
    %v920 = vpack.c.b16 %v842, %v840
    %v921 = vpack.c.b16 %v843, %v841
    %v922 = vpack.c.b16 %v846, %v844
    %v923 = vpack.c.b16 %v847, %v845
    %v924 = vpack.c.b16 %v850, %v848
    %v925 = vpack.c.b16 %v851, %v849
    %v926 = vpack.c.b16 %v854, %v852
    %v927 = vpack.c.b16 %v855, %v853
    %v928 = vpack.c.b16 %v858, %v856
    %v929 = vpack.c.b16 %v859, %v857
    %v930 = vpack.c.b16 %v862, %v860
    %v931 = vpack.c.b16 %v863, %v861
    %v932 = vpack.c.b16 %v866, %v864
    %v933 = vpack.c.b16 %v867, %v865
    %v934 = vpack.c.b16 %v870, %v868
    %v935 = vpack.c.b16 %v871, %v869
    %1000 = vmatprep.subr.bf16.mxu0 %v873
    %1001 = vmatpush1.bf16.msra.mxu0 %v872
    %1002 = vmatprep.subr.bf16.mxu0 %v875
    %1003 = vmatpush1.bf16.msra.mxu0 %v874
    %1004 = vmatprep.subr.bf16.mxu0 %v877
    %1005 = vmatpush1.bf16.msra.mxu0 %v876
    %1006 = vmatprep.subr.bf16.mxu0 %v879
    %1007 = vmatpush1.bf16.msra.mxu0 %v878
    %1008 = vmatprep.subr.bf16.mxu0 %v881
    %1009 = vmatpush1.bf16.msra.mxu0 %v880
    %1010 = vmatprep.subr.bf16.mxu0 %v883
    %1011 = vmatpush1.bf16.msra.mxu0 %v882
    %1012 = vmatprep.subr.bf16.mxu0 %v885
    %1013 = vmatpush1.bf16.msra.mxu0 %v884
    %1014 = vmatprep.subr.bf16.mxu0 %v887
    %1015 = vmatpush1.bf16.msra.mxu0 %v886
    %1016 = vmatprep.subr.bf16.mxu0 %v889
    %1017 = vmatpush1.bf16.msra.mxu0 %v888
    %1018 = vmatprep.subr.bf16.mxu0 %v891
    %1019 = vmatpush1.bf16.msra.mxu0 %v890
    %1020 = vmatprep.subr.bf16.mxu0 %v893
    %1021 = vmatpush1.bf16.msra.mxu0 %v892
    %1022 = vmatprep.subr.bf16.mxu0 %v895
    %1023 = vmatpush1.bf16.msra.mxu0 %v894
    %1024 = vmatprep.subr.bf16.mxu0 %v897
    %1025 = vmatpush1.bf16.msra.mxu0 %v896
    %1026 = vmatprep.subr.bf16.mxu0 %v899
    %1027 = vmatpush1.bf16.msra.mxu0 %v898
    %1028 = vmatprep.subr.bf16.mxu0 %v901
    %1029 = vmatpush1.bf16.msra.mxu0 %v900
    %1030 = vmatprep.subr.bf16.mxu0 %v903
    %1031 = vmatpush1.bf16.msra.mxu0 %v902
    %1032 = vmatprep.mubr.bf16.mxu0 %v601
    %1033 = vmatmul.mubr.bf16.gmra.mrb[0].mxu0 %v600
    %v1034 = vpop.f32.mrb[0].mxu0
    %v1035 = vadd.f32 %v673, %v1034
    %v1036 = vpop.f32.mrb[0].mxu0
    %v1037 = vadd.f32 %v677, %v1036
    %v1038 = vpop.f32.mrb[0].mxu0
    %v1039 = vpop.f32.mrb[0].mxu0
    %1040 = vdwg.mxu0
    %1041 = vmatprep.subr.bf16.mxu0 %v905
    %1042 = vmatpush1.bf16.msra.mxu0 %v904
    %1043 = vmatprep.subr.bf16.mxu0 %v907
    %1044 = vmatpush1.bf16.msra.mxu0 %v906
    %1045 = vmatprep.subr.bf16.mxu0 %v909
    %1046 = vmatpush1.bf16.msra.mxu0 %v908
    %1047 = vmatprep.subr.bf16.mxu0 %v911
    %1048 = vmatpush1.bf16.msra.mxu0 %v910
    %1049 = vmatprep.subr.bf16.mxu0 %v913
    %1050 = vmatpush1.bf16.msra.mxu0 %v912
    %1051 = vmatprep.subr.bf16.mxu0 %v915
    %1052 = vmatpush1.bf16.msra.mxu0 %v914
    %1053 = vmatprep.subr.bf16.mxu0 %v917
    %1054 = vmatpush1.bf16.msra.mxu0 %v916
    %1055 = vmatprep.subr.bf16.mxu0 %v919
    %1056 = vmatpush1.bf16.msra.mxu0 %v918
    %1057 = vmatprep.subr.bf16.mxu0 %v921
    %1058 = vmatpush1.bf16.msra.mxu0 %v920
    %1059 = vmatprep.subr.bf16.mxu0 %v923
    %1060 = vmatpush1.bf16.msra.mxu0 %v922
    %1061 = vmatprep.subr.bf16.mxu0 %v925
    %1062 = vmatpush1.bf16.msra.mxu0 %v924
    %1063 = vmatprep.subr.bf16.mxu0 %v927
    %1064 = vmatpush1.bf16.msra.mxu0 %v926
    %1065 = vmatprep.subr.bf16.mxu0 %v929
    %1066 = vmatpush1.bf16.msra.mxu0 %v928
    %1067 = vmatprep.subr.bf16.mxu0 %v931
    %1068 = vmatpush1.bf16.msra.mxu0 %v930
    %1069 = vmatprep.subr.bf16.mxu0 %v933
    %1070 = vmatpush1.bf16.msra.mxu0 %v932
    %1071 = vmatprep.subr.bf16.mxu0 %v935
    %1072 = vmatpush1.bf16.msra.mxu0 %v934
    %1073 = vmatprep.mubr.bf16.mxu0 %v603
    %1074 = vmatmul.mubr.bf16.gmra.mrb[0].mxu0 %v602
    %v1075 = vpop.f32.mrb[0].mxu0
    %v1076 = vadd.f32 %v1035, %v1075
    %v1077 = vpop.f32.mrb[0].mxu0
    %v1078 = vadd.f32 %v1037, %v1077
    %v1079 = vpop.f32.mrb[0].mxu0
    %v1080 = vpop.f32.mrb[0].mxu0
    %1081 = vdwg.mxu0
    %v1082 = vmax.f32 %v1076, 0.0
    %v1083 = vmax.f32 %v1078, 0.0
    %v1084 = vpack.c.bf16 %v1082, %v1082
    %v1085 = vpack.c.bf16 %v1083, %v1083
    %v1086 = vld [vmem:[#allocation8] sm:$0xf]
    %v1087 = vld [vmem:[#allocation8 + $0x4] sm:$0xf]
    %v1088 = vld [vmem:[#allocation8 + $0x8] sm:$0xf]
    %v1089 = vld [vmem:[#allocation8 + $0xc] sm:$0xf]
    %v1090 = vld [vmem:[#allocation8 + $0x10] sm:$0xf]
    %v1091 = vld [vmem:[#allocation8 + $0x14] sm:$0xf]
    %v1092 = vld [vmem:[#allocation8 + $0x18] sm:$0xf]
    %v1093 = vld [vmem:[#allocation8 + $0x1c] sm:$0xf]
    %v1094 = vld [vmem:[#allocation8 + $0x20] sm:$0xf]
    %v1095 = vld [vmem:[#allocation8 + $0x24] sm:$0xf]
    %v1096 = vld [vmem:[#allocation8 + $0x28] sm:$0xf]
    %v1097 = vld [vmem:[#allocation8 + $0x2c] sm:$0xf]
    %v1098 = vld [vmem:[#allocation8 + $0x30] sm:$0xf]
    %v1099 = vld [vmem:[#allocation8 + $0x34] sm:$0xf]
    %v1100 = vld [vmem:[#allocation8 + $0x38] sm:$0xf]
    %v1101 = vld [vmem:[#allocation8 + $0x3c] sm:$0xf]
    %v1102 = vld [vmem:[#allocation8 + $0x40] sm:$0xf]
    %v1103 = vld [vmem:[#allocation8 + $0x44] sm:$0xf]
    %v1104 = vld [vmem:[#allocation8 + $0x48] sm:$0xf]
    %v1105 = vld [vmem:[#allocation8 + $0x4c] sm:$0xf]
    %v1106 = vld [vmem:[#allocation8 + $0x50] sm:$0xf]
    %v1107 = vld [vmem:[#allocation8 + $0x54] sm:$0xf]
    %v1108 = vld [vmem:[#allocation8 + $0x58] sm:$0xf]
    %v1109 = vld [vmem:[#allocation8 + $0x5c] sm:$0xf]
    %v1110 = vld [vmem:[#allocation8 + $0x60] sm:$0xf]
    %v1111 = vld [vmem:[#allocation8 + $0x64] sm:$0xf]
    %v1112 = vld [vmem:[#allocation8 + $0x68] sm:$0xf]
    %v1113 = vld [vmem:[#allocation8 + $0x6c] sm:$0xf]
    %v1114 = vld [vmem:[#allocation8 + $0x70] sm:$0xf]
    %v1115 = vld [vmem:[#allocation8 + $0x74] sm:$0xf]
    %v1116 = vld [vmem:[#allocation8 + $0x78] sm:$0xf]
    %v1117 = vld [vmem:[#allocation8 + $0x7c] sm:$0xf]
    %v1118 = vld [vmem:[%s6] sm:$0x1]
    %v1120 = vlaneseq
    %v1121 = vshrl.u32 %v1120, 7
    %v1122 = vsub.s32 0, %v1121
    %v1123 = vrot.slane %v1118, %v1122
    %v1157 = vunpack.c.l.b16 %v1086
    %v1158 = vunpack.c.l.b16 %v1087
    %v1159 = vunpack.c.l.b16 %v1088
    %v1160 = vunpack.c.l.b16 %v1089
    %v1161 = vunpack.c.l.b16 %v1090
    %v1162 = vunpack.c.l.b16 %v1091
    %v1163 = vunpack.c.l.b16 %v1092
    %v1164 = vunpack.c.l.b16 %v1093
    %v1165 = vunpack.c.l.b16 %v1094
    %v1166 = vunpack.c.l.b16 %v1095
    %v1167 = vunpack.c.l.b16 %v1096
    %v1168 = vunpack.c.l.b16 %v1097
    %v1169 = vunpack.c.l.b16 %v1098
    %v1170 = vunpack.c.l.b16 %v1099
    %v1171 = vunpack.c.l.b16 %v1100
    %v1172 = vunpack.c.l.b16 %v1101
    %v1173 = vunpack.c.l.b16 %v1102
    %v1174 = vunpack.c.l.b16 %v1103
    %v1175 = vunpack.c.l.b16 %v1104
    %v1176 = vunpack.c.l.b16 %v1105
    %v1177 = vunpack.c.l.b16 %v1106
    %v1178 = vunpack.c.l.b16 %v1107
    %v1179 = vunpack.c.l.b16 %v1108
    %v1180 = vunpack.c.l.b16 %v1109
    %v1181 = vunpack.c.l.b16 %v1110
    %v1182 = vunpack.c.l.b16 %v1111
    %v1183 = vunpack.c.l.b16 %v1112
    %v1184 = vunpack.c.l.b16 %v1113
    %v1185 = vunpack.c.l.b16 %v1114
    %v1186 = vunpack.c.l.b16 %v1115
    %v1187 = vunpack.c.l.b16 %v1116
    %v1188 = vunpack.c.l.b16 %v1117
    %v1189 = vpack.c.b16 %v1158, %v1157
    %v1190 = vpack.c.b16 %v1160, %v1159
    %v1191 = vpack.c.b16 %v1162, %v1161
    %v1192 = vpack.c.b16 %v1164, %v1163
    %v1193 = vpack.c.b16 %v1166, %v1165
    %v1194 = vpack.c.b16 %v1168, %v1167
    %v1195 = vpack.c.b16 %v1170, %v1169
    %v1196 = vpack.c.b16 %v1172, %v1171
    %v1197 = vpack.c.b16 %v1174, %v1173
    %v1198 = vpack.c.b16 %v1176, %v1175
    %v1199 = vpack.c.b16 %v1178, %v1177
    %v1200 = vpack.c.b16 %v1180, %v1179
    %v1201 = vpack.c.b16 %v1182, %v1181
    %v1202 = vpack.c.b16 %v1184, %v1183
    %v1203 = vpack.c.b16 %v1186, %v1185
    %v1204 = vpack.c.b16 %v1188, %v1187
    %1221 = vmatprep.subr.bf16.mxu0 0
    %1222 = vmatpush1.bf16.msra.mxu0 %v1189
    %1223 = vmatprep.subr.bf16.mxu0 0
    %1224 = vmatpush1.bf16.msra.mxu0 %v1190
    %1225 = vmatprep.subr.bf16.mxu0 0
    %1226 = vmatpush1.bf16.msra.mxu0 %v1191
    %1227 = vmatprep.subr.bf16.mxu0 0
    %1228 = vmatpush1.bf16.msra.mxu0 %v1192
    %1229 = vmatprep.subr.bf16.mxu0 0
    %1230 = vmatpush1.bf16.msra.mxu0 %v1193
    %1231 = vmatprep.subr.bf16.mxu0 0
    %1232 = vmatpush1.bf16.msra.mxu0 %v1194
    %1233 = vmatprep.subr.bf16.mxu0 0
    %1234 = vmatpush1.bf16.msra.mxu0 %v1195
    %1235 = vmatprep.subr.bf16.mxu0 0
    %1236 = vmatpush1.bf16.msra.mxu0 %v1196
    %1237 = vmatprep.subr.bf16.mxu0 0
    %1238 = vmatpush1.bf16.msra.mxu0 %v1197
    %1239 = vmatprep.subr.bf16.mxu0 0
    %1240 = vmatpush1.bf16.msra.mxu0 %v1198
    %1241 = vmatprep.subr.bf16.mxu0 0
    %1242 = vmatpush1.bf16.msra.mxu0 %v1199
    %1243 = vmatprep.subr.bf16.mxu0 0
    %1244 = vmatpush1.bf16.msra.mxu0 %v1200
    %1245 = vmatprep.subr.bf16.mxu0 0
    %1246 = vmatpush1.bf16.msra.mxu0 %v1201
    %1247 = vmatprep.subr.bf16.mxu0 0
    %1248 = vmatpush1.bf16.msra.mxu0 %v1202
    %1249 = vmatprep.subr.bf16.mxu0 0
    %1250 = vmatpush1.bf16.msra.mxu0 %v1203
    %1251 = vmatprep.subr.bf16.mxu0 0
    %1252 = vmatpush1.bf16.msra.mxu0 %v1204
    %1253 = vmatprep.mubr.bf16.mxu0 %v1085
    %1254 = vmatmul.mubr.bf16.gmra.mrb[0].mxu0 %v1084
    %v1255 = vpop.f32.mrb[0].mxu0
    %v1256 = vadd.f32 %v1123, %v1255
    %v1257 = vpop.f32.mrb[0].mxu0
    %v1258 = vpop.f32.mrb[0].mxu0
    %v1259 = vpop.f32.mrb[0].mxu0
    %1260 = vdwg.mxu0
    %v1261 = vmax.f32 %v1256, 0.0
    %v1262 = vpack.c.bf16 %v1261, %v1261
    %v1263 = vld [vmem:[#allocation10] sm:$0xf]
    %v1264 = vld [vmem:[#allocation10 + $0x4] sm:$0xf]
    %v1265 = vld [vmem:[#allocation10 + $0x8] sm:$0xf]
    %v1266 = vld [vmem:[#allocation10 + $0xc] sm:$0xf]
    %v1267 = vld [vmem:[#allocation10 + $0x10] sm:$0xf]
    %v1268 = vld [vmem:[#allocation10 + $0x14] sm:$0xf]
    %v1269 = vld [vmem:[#allocation10 + $0x18] sm:$0xf]
    %v1270 = vld [vmem:[#allocation10 + $0x1c] sm:$0xf]
    %v1271 = vld [vmem:[#allocation10 + $0x20] sm:$0xf]
    %v1272 = vld [vmem:[#allocation10 + $0x24] sm:$0xf]
    %v1273 = vld [vmem:[#allocation10 + $0x28] sm:$0xf]
    %v1274 = vld [vmem:[#allocation10 + $0x2c] sm:$0xf]
    %v1275 = vld [vmem:[#allocation10 + $0x30] sm:$0xf]
    %v1276 = vld [vmem:[#allocation10 + $0x34] sm:$0xf]
    %v1277 = vld [vmem:[#allocation10 + $0x38] sm:$0xf]
    %v1278 = vld [vmem:[#allocation10 + $0x3c] sm:$0xf]
    %v1279 = vld [vmem:[%s8] sm:$0x1]
    %v1281 = vlaneseq
    %v1282 = vshrl.u32 %v1281, 7
    %v1283 = vsub.s32 0, %v1282
    %v1284 = vrot.slane %v1279, %v1283
    %v1302 = vunpack.c.l.b16 %v1263
    %v1303 = vunpack.c.l.b16 %v1264
    %v1304 = vunpack.c.l.b16 %v1265
    %v1305 = vunpack.c.l.b16 %v1266
    %v1306 = vunpack.c.l.b16 %v1267
    %v1307 = vunpack.c.l.b16 %v1268
    %v1308 = vunpack.c.l.b16 %v1269
    %v1309 = vunpack.c.l.b16 %v1270
    %v1310 = vunpack.c.l.b16 %v1271
    %v1311 = vunpack.c.l.b16 %v1272
    %v1312 = vunpack.c.l.b16 %v1273
    %v1313 = vunpack.c.l.b16 %v1274
    %v1314 = vunpack.c.l.b16 %v1275
    %v1315 = vunpack.c.l.b16 %v1276
    %v1316 = vunpack.c.l.b16 %v1277
    %v1317 = vunpack.c.l.b16 %v1278
    %v1318 = vpack.c.b16 %v1303, %v1302
    %v1319 = vpack.c.b16 %v1305, %v1304
    %v1320 = vpack.c.b16 %v1307, %v1306
    %v1321 = vpack.c.b16 %v1309, %v1308
    %v1322 = vpack.c.b16 %v1311, %v1310
    %v1323 = vpack.c.b16 %v1313, %v1312
    %v1324 = vpack.c.b16 %v1315, %v1314
    %v1325 = vpack.c.b16 %v1317, %v1316
    %1334 = vmatprep.subr.bf16.mxu0 0
    %1335 = vmatpush1.bf16.msra.mxu0 %v1318
    %1336 = vmatprep.subr.bf16.mxu0 0
    %1337 = vmatpush1.bf16.msra.mxu0 %v1319
    %1338 = vmatprep.subr.bf16.mxu0 0
    %1339 = vmatpush1.bf16.msra.mxu0 %v1320
    %1340 = vmatprep.subr.bf16.mxu0 0
    %1341 = vmatpush1.bf16.msra.mxu0 %v1321
    %1342 = vmatprep.subr.bf16.mxu0 0
    %1343 = vmatpush1.bf16.msra.mxu0 %v1322
    %1344 = vmatprep.subr.bf16.mxu0 0
    %1345 = vmatpush1.bf16.msra.mxu0 %v1323
    %1346 = vmatprep.subr.bf16.mxu0 0
    %1347 = vmatpush1.bf16.msra.mxu0 %v1324
    %1348 = vmatprep.subr.bf16.mxu0 0
    %1349 = vmatpush1.bf16.msra.mxu0 %v1325
    %1350 = vmatprep.subr.bf16.mxu0 0
    %1351 = vmatpush1.bf16.msra.mxu0 0
    %1352 = vmatprep.subr.bf16.mxu0 0
    %1353 = vmatpush1.bf16.msra.mxu0 0
    %1354 = vmatprep.subr.bf16.mxu0 0
    %1355 = vmatpush1.bf16.msra.mxu0 0
    %1356 = vmatprep.subr.bf16.mxu0 0
    %1357 = vmatpush1.bf16.msra.mxu0 0
    %1358 = vmatprep.subr.bf16.mxu0 0
    %1359 = vmatpush1.bf16.msra.mxu0 0
    %1360 = vmatprep.subr.bf16.mxu0 0
    %1361 = vmatpush1.bf16.msra.mxu0 0
    %1362 = vmatprep.subr.bf16.mxu0 0
    %1363 = vmatpush1.bf16.msra.mxu0 0
    %1364 = vmatprep.subr.bf16.mxu0 0
    %1365 = vmatpush1.bf16.msra.mxu0 0
    %1366 = vmatprep.mubr.bf16.mxu0 0
    %1367 = vmatmul.mubr.bf16.gmra.mrb[0].mxu0 %v1262
    %v1368 = vpop.f32.mrb[0].mxu0
    %v1369 = vadd.f32 %v1284, %v1368
    %v1370 = vpop.f32.mrb[0].mxu0
    %v1371 = vpop.f32.mrb[0].mxu0
    %v1372 = vpop.f32.mrb[0].mxu0
    %1373 = vdwg.mxu0
    %1374 = vst [vmem:[#allocation11] sm:$0xff] %v1369
    // Predicated region
    $region58: #{tpu_custom_call.1} parent=1 // pred_check
      _
    $region59: #{tpu_custom_call.1} parent=1 // pred_check_branch
      %1376 = sbr.rel (0) target = $region61
    $region60: #{tpu_custom_call.1} parent=1 // pred_region
      %s1378 = ssub.s32 128, 128
      %1379 = vsyncadd [#allocation4], %s1378
      %s1381 = sshll.u32 [#allocation11], 4
      %s1382 = int_to_ptr.vmem [resolvable:$true] %s1381
      %1384 = dma.vmem_to_hbm [thread:$0]  %s1382, 128, %s9, [#allocation4]
    $region61: #{tpu_custom_call.1} parent=1 // pred_fallthru
      _
    // Predicated region
    $region62: #{tpu_custom_call.1} parent=1 // pred_check
      _
    $region63: #{tpu_custom_call.1} parent=1 // pred_check_branch
      %1386 = sbr.rel (0) target = $region65
    $region64: #{tpu_custom_call.1} parent=1 // pred_region
      %1387 = dma.done [#allocation4], 128
    $region65: #{tpu_custom_call.1} parent=1 // pred_fallthru
      _
    %1388 = vsyncpa [#allocation3], 1
    %1389 = vsyncpa [#allocation6], 1
    %1390 = vsyncpa [#allocation9], 1
    %1391 = vsyncpa [#allocation4], 1

</llo_original>
